<compile_context>
chip_gen: v6e
topology: v6e:2x2x1
jax: 0.10.0
libtpu: 0.0.40
codegen_flags: <defaults>
</compile_context>

<pallas_src>
import functools

import jax
import jax.numpy as jnp
from jax.experimental import pallas as pl
from jax.experimental.pallas import tpu as pltpu


def _pool_phases(length, out_length, kernel_size, stride, padding):
    """Static (start, count, out_lo) triples for one pooled axis.

    Window phase k contributes to output indices [out_lo, out_lo + count) using input
    taps start, start + stride, ... (all guaranteed in-bounds); taps that would fall
    into the implicit -inf padding are excluded by construction.
    """
    phases = []
    for k in range(kernel_size):
        # output index i is valid iff 0 <= stride*i + k - padding <= length - 1
        i_lo = max(0, -(-(padding - k) // stride))                 # ceil((p-k)/S)
        i_hi = min(out_length - 1, (length - 1 - k + padding) // stride)
        if i_hi < i_lo:
            continue
        count = i_hi - i_lo + 1
        start = stride * i_lo + k - padding
        phases.append((start, count, i_lo))
    # Put a full-coverage phase (if any) first so the kernel can use it as the
    # initializer and skip the pad-value fill.
    phases.sort(key=lambda t: not (t[2] == 0 and t[1] == out_length))
    return tuple(phases)


def _maxpool_kernel(x_ref, o_ref, hs_ref, ws_ref, os_ref, *,
                    h_phases, w_phases, stride, pad_val):
    """x_ref: (bc, H, W); o_ref: (bc, Ho, Wo);
    hs_ref: (bc, Ho, W); ws_ref: (bc, W, Ho); os_ref: (bc, Wo, Ho)."""

    def reduce_axis(src_ref, dst_ref, phases):
        # Pool the second-minor axis of `src_ref` into `dst_ref`: each phase is one
        # sublane-strided load + a dense slab maximum onto a static sub-range of output
        # rows.  Padding taps are never loaded, so no -inf data ever enters a vreg
        # unless a window has no valid tap at all (impossible for padding <= K/2).
        full = dst_ref.shape[1]
        initialized = False
        for start, count, out_lo in phases:
            v = src_ref[:, pl.ds(start, count, stride=stride), :]
            if not initialized and out_lo == 0 and count == full:
                dst_ref[...] = v
            else:
                if not initialized:
                    dst_ref[...] = jnp.full(dst_ref.shape, pad_val, dst_ref.dtype)
                sl = slice(out_lo, out_lo + count)
                dst_ref[:, sl, :] = jnp.maximum(dst_ref[:, sl, :], v)
            initialized = True
        if not initialized:
            dst_ref[...] = jnp.full(dst_ref.shape, pad_val, dst_ref.dtype)

    # ---- pool over kernel-H (H is the second-minor axis of the NCHW block) ----
    reduce_axis(x_ref, hs_ref, h_phases)              # -> (bc, Ho, W)
    # ---- move W to the second-minor axis; data is already 3x reduced, XLU is idle ----
    ws_ref[...] = jnp.swapaxes(hs_ref[...], 1, 2)     # -> (bc, W, Ho)
    # ---- pool over kernel-W with the same strided-load + slab-max pattern ----
    reduce_axis(ws_ref, os_ref, w_phases)             # -> (bc, Wo, Ho)
    # ---- back to (bc, Ho, Wo) and store (dense, no size-1 dims) ----
    o_ref[...] = jnp.swapaxes(os_ref[...], 1, 2)


def down_sample(x, *, padding=1, kernel_size=3, stride=3):
    """MaxPool2d(kernel_size, stride, padding) on NCHW input, PyTorch semantics."""
    n, c, h, w = x.shape
    h_out = (h + 2 * padding - kernel_size) // stride + 1
    w_out = (w + 2 * padding - kernel_size) // stride + 1

    # PyTorch pads with -inf for floats; use dtype-min for integer inputs.
    if jnp.issubdtype(x.dtype, jnp.floating):
        pad_val = float("-inf")
    else:
        pad_val = int(jnp.iinfo(x.dtype).min)

    h_phases = _pool_phases(h, h_out, kernel_size, stride, padding)
    w_phases = _pool_phases(w, w_out, kernel_size, stride, padding)

    # ---- channel-block size from per-chip VMEM capacity (v5e/v6e 128 MiB, v7x 64 MiB) ----
    itemsize = jnp.dtype(x.dtype).itemsize
    sub = max(8, 32 // itemsize)            # sublane multiple: f32 8, bf16 16, int8 32

    def tile_bytes(rows, cols):             # padded per-channel VMEM bytes of a (rows, cols) tile
        return (-(-rows // sub) * sub) * (-(-cols // 128) * 128) * itemsize

    per_c = (2 * tile_bytes(h, w)               # double-buffered input block
             + 2 * tile_bytes(h_out, w_out)     # double-buffered output block
             + tile_bytes(h_out, w)             # hs scratch
             + tile_bytes(w, h_out)             # ws scratch (transposed)
             + tile_bytes(w_out, h_out))        # os scratch

    try:
        vmem_cap = int(pltpu.get_tpu_info().vmem_capacity_bytes)
    except Exception:
        vmem_cap = 64 * 1024 * 1024             # conservative (v7x-sized) fallback
    budget = min(int(0.4 * vmem_cap), 48 * 1024 * 1024)

    bc = max(1, min(c, budget // max(1, per_c)))
    # Keep >= 2 (parallel) grid steps so a 2-TensorCore part (v7x) shards the work;
    # the split is balanced (ceil(c/2) + rest) and lands on a "parallel" grid axis.
    if n * pl.cdiv(c, bc) < 2 and c >= 2:
        bc = -(-c // 2)
    grid = (n, pl.cdiv(c, bc))

    needed = bc * per_c
    vmem_limit = int(min(vmem_cap, max(32 * 1024 * 1024, int(1.25 * needed) + (2 << 20))))
    # TODO(synk): planes too large for VMEM (single-channel block > budget) would need
    # output-row blocking with halo rows; not required for this module's small feature maps.

    kernel = functools.partial(
        _maxpool_kernel,
        h_phases=h_phases, w_phases=w_phases, stride=stride, pad_val=pad_val)

    return pl.pallas_call(
        kernel,
        out_shape=jax.ShapeDtypeStruct((n, c, h_out, w_out), x.dtype),
        grid=grid,
        in_specs=[pl.BlockSpec((None, bc, h, w), lambda b, cb: (b, cb, 0, 0))],
        out_specs=pl.BlockSpec((None, bc, h_out, w_out), lambda b, cb: (b, cb, 0, 0)),
        scratch_shapes=[
            pltpu.VMEM((bc, h_out, w), x.dtype),     # H-reduced intermediate
            pltpu.VMEM((bc, w, h_out), x.dtype),     # transposed intermediate
            pltpu.VMEM((bc, w_out, h_out), x.dtype),  # W-reduced (transposed) result
        ],
        compiler_params=pltpu.CompilerParams(
            dimension_semantics=("parallel", "parallel"),
            vmem_limit_bytes=vmem_limit),
    )(x)


def _reference_maxpool(x, *, padding=1, kernel_size=3, stride=3):
    """Pure-JAX reference (lax.reduce_window) for validation (float inputs only)."""
    return jax.lax.reduce_window(
        x,
        -jnp.inf,
        jax.lax.max,
        window_dimensions=(1, 1, kernel_size, kernel_size),
        window_strides=(1, 1, stride, stride),
        padding=((0, 0), (0, 0), (padding, padding), (padding, padding)),
    )


if __name__ == "__main__":
    key = jax.random.PRNGKey(0)
    x = jax.random.normal(key, (2, 4, 16, 16), dtype=jnp.float32)

    out = jax.block_until_ready(down_sample(x))      # (2, 4, 6, 6)

    ref = _reference_maxpool(x)
    assert out.shape == ref.shape, (out.shape, ref.shape)
    assert jnp.allclose(out, ref), "Pallas maxpool mismatch vs reference"

    print("KERNEL_OK")
</pallas_src>

<mosaic_0001>
module attributes {stable_mosaic.version = 11 : i64} {
  func.func @_maxpool_kernel(%arg0: i32, %arg1: i32, %arg2: memref<1x4x16x16xf32, #tpu.memory_space<vmem>>, %arg3: memref<1x4x6x6xf32, #tpu.memory_space<vmem>>, %arg4: memref<4x6x16xf32, #tpu.memory_space<vmem>>, %arg5: memref<4x16x6xf32, #tpu.memory_space<vmem>>, %arg6: memref<4x6x6xf32, #tpu.memory_space<vmem>>) attributes {dimension_semantics = [#tpu.dimension_semantics<parallel>, #tpu.dimension_semantics<parallel>], iteration_bounds = array<i64: 2, 1>, scalar_prefetch = 0 : i64, scratch_operands = 3 : i64, tpu.core_type = #tpu.core_type<tc>, window_params = [{transform_indices = @transform_0, window_bounds = array<i64: 1, 4, 16, 16>}, {transform_indices = @transform_1, window_bounds = array<i64: 1, 4, 6, 6>}]} {
    %c0 = arith.constant 0 : index
    %c0_0 = arith.constant 0 : index
    %c0_1 = arith.constant 0 : index
    %c0_2 = arith.constant 0 : index
    %0 = tpu.strided_load %arg2[%c0, %c0_0, %c0_1, %c0_2] {strides = array<i32: 1, 1, 3, 1>} : memref<1x4x16x16xf32, #tpu.memory_space<vmem>>, vector<1x4x6x16xf32>
    %1 = vector.shape_cast %0 : vector<1x4x6x16xf32> to vector<4x6x16xf32>
    %c0_3 = arith.constant 0 : index
    %c0_4 = arith.constant 0 : index
    %c0_5 = arith.constant 0 : index
    %2 = vector.load %arg4[%c0_3, %c0_4, %c0_5] : memref<4x6x16xf32, #tpu.memory_space<vmem>>, vector<4x6x16xf32>
    tpu.vector_store %arg4[%c0_3, %c0_4, %c0_5], %1 {strides = array<i32>} : memref<4x6x16xf32, #tpu.memory_space<vmem>>, vector<4x6x16xf32>,
    %c0_6 = arith.constant 0 : index
    %c0_7 = arith.constant 0 : index
    %c2 = arith.constant 2 : index
    %c0_8 = arith.constant 0 : index
    %3 = tpu.strided_load %arg2[%c0_6, %c0_7, %c2, %c0_8] {strides = array<i32: 1, 1, 3, 1>} : memref<1x4x16x16xf32, #tpu.memory_space<vmem>>, vector<1x4x5x16xf32>
    %4 = vector.shape_cast %3 : vector<1x4x5x16xf32> to vector<4x5x16xf32>
    %c0_9 = arith.constant 0 : index
    %c1 = arith.constant 1 : index
    %c0_10 = arith.constant 0 : index
    %5 = vector.load %arg4[%c0_9, %c1, %c0_10] : memref<4x6x16xf32, #tpu.memory_space<vmem>>, vector<4x5x16xf32>
    %6 = arith.maximumf %5, %4 : vector<4x5x16xf32>
    %c0_11 = arith.constant 0 : index
    %c1_12 = arith.constant 1 : index
    %c0_13 = arith.constant 0 : index
    %7 = vector.load %arg4[%c0_11, %c1_12, %c0_13] : memref<4x6x16xf32, #tpu.memory_space<vmem>>, vector<4x5x16xf32>
    tpu.vector_store %arg4[%c0_11, %c1_12, %c0_13], %6 {strides = array<i32>} : memref<4x6x16xf32, #tpu.memory_space<vmem>>, vector<4x5x16xf32>,
    %c0_14 = arith.constant 0 : index
    %c0_15 = arith.constant 0 : index
    %c1_16 = arith.constant 1 : index
    %c0_17 = arith.constant 0 : index
    %8 = tpu.strided_load %arg2[%c0_14, %c0_15, %c1_16, %c0_17] {strides = array<i32: 1, 1, 3, 1>} : memref<1x4x16x16xf32, #tpu.memory_space<vmem>>, vector<1x4x5x16xf32>
    %9 = vector.shape_cast %8 : vector<1x4x5x16xf32> to vector<4x5x16xf32>
    %c0_18 = arith.constant 0 : index
    %c0_19 = arith.constant 0 : index
    %c0_20 = arith.constant 0 : index
    %10 = vector.load %arg4[%c0_18, %c0_19, %c0_20] : memref<4x6x16xf32, #tpu.memory_space<vmem>>, vector<4x5x16xf32>
    %11 = arith.maximumf %10, %9 : vector<4x5x16xf32>
    %c0_21 = arith.constant 0 : index
    %c0_22 = arith.constant 0 : index
    %c0_23 = arith.constant 0 : index
    %12 = vector.load %arg4[%c0_21, %c0_22, %c0_23] : memref<4x6x16xf32, #tpu.memory_space<vmem>>, vector<4x5x16xf32>
    tpu.vector_store %arg4[%c0_21, %c0_22, %c0_23], %11 {strides = array<i32>} : memref<4x6x16xf32, #tpu.memory_space<vmem>>, vector<4x5x16xf32>,
    %c0_24 = arith.constant 0 : index
    %c0_25 = arith.constant 0 : index
    %c0_26 = arith.constant 0 : index
    %13 = vector.load %arg4[%c0_24, %c0_25, %c0_26] : memref<4x6x16xf32, #tpu.memory_space<vmem>>, vector<4x6x16xf32>
    %14 = tpu.transpose %13, [0, 2, 1] : vector<4x6x16xf32> -> vector<4x16x6xf32>
    %c0_27 = arith.constant 0 : index
    %c0_28 = arith.constant 0 : index
    %c0_29 = arith.constant 0 : index
    %15 = vector.load %arg5[%c0_27, %c0_28, %c0_29] : memref<4x16x6xf32, #tpu.memory_space<vmem>>, vector<4x16x6xf32>
    tpu.vector_store %arg5[%c0_27, %c0_28, %c0_29], %14 {strides = array<i32>} : memref<4x16x6xf32, #tpu.memory_space<vmem>>, vector<4x16x6xf32>,
    %c0_30 = arith.constant 0 : index
    %c0_31 = arith.constant 0 : index
    %c0_32 = arith.constant 0 : index
    %16 = tpu.strided_load %arg5[%c0_30, %c0_31, %c0_32] {strides = array<i32: 1, 3, 1>} : memref<4x16x6xf32, #tpu.memory_space<vmem>>, vector<4x6x6xf32>
    %c0_33 = arith.constant 0 : index
    %c0_34 = arith.constant 0 : index
    %c0_35 = arith.constant 0 : index
    %17 = vector.load %arg6[%c0_33, %c0_34, %c0_35] : memref<4x6x6xf32, #tpu.memory_space<vmem>>, vector<4x6x6xf32>
    tpu.vector_store %arg6[%c0_33, %c0_34, %c0_35], %16 {strides = array<i32>} : memref<4x6x6xf32, #tpu.memory_space<vmem>>, vector<4x6x6xf32>,
    %c0_36 = arith.constant 0 : index
    %c2_37 = arith.constant 2 : index
    %c0_38 = arith.constant 0 : index
    %18 = tpu.strided_load %arg5[%c0_36, %c2_37, %c0_38] {strides = array<i32: 1, 3, 1>} : memref<4x16x6xf32, #tpu.memory_space<vmem>>, vector<4x5x6xf32>
    %c0_39 = arith.constant 0 : index
    %c1_40 = arith.constant 1 : index
    %c0_41 = arith.constant 0 : index
    %19 = vector.load %arg6[%c0_39, %c1_40, %c0_41] : memref<4x6x6xf32, #tpu.memory_space<vmem>>, vector<4x5x6xf32>
    %20 = arith.maximumf %19, %18 : vector<4x5x6xf32>
    %c0_42 = arith.constant 0 : index
    %c1_43 = arith.constant 1 : index
    %c0_44 = arith.constant 0 : index
    %21 = vector.load %arg6[%c0_42, %c1_43, %c0_44] : memref<4x6x6xf32, #tpu.memory_space<vmem>>, vector<4x5x6xf32>
    tpu.vector_store %arg6[%c0_42, %c1_43, %c0_44], %20 {strides = array<i32>} : memref<4x6x6xf32, #tpu.memory_space<vmem>>, vector<4x5x6xf32>,
    %c0_45 = arith.constant 0 : index
    %c1_46 = arith.constant 1 : index
    %c0_47 = arith.constant 0 : index
    %22 = tpu.strided_load %arg5[%c0_45, %c1_46, %c0_47] {strides = array<i32: 1, 3, 1>} : memref<4x16x6xf32, #tpu.memory_space<vmem>>, vector<4x5x6xf32>
    %c0_48 = arith.constant 0 : index
    %c0_49 = arith.constant 0 : index
    %c0_50 = arith.constant 0 : index
    %23 = vector.load %arg6[%c0_48, %c0_49, %c0_50] : memref<4x6x6xf32, #tpu.memory_space<vmem>>, vector<4x5x6xf32>
    %24 = arith.maximumf %23, %22 : vector<4x5x6xf32>
    %c0_51 = arith.constant 0 : index
    %c0_52 = arith.constant 0 : index
    %c0_53 = arith.constant 0 : index
    %25 = vector.load %arg6[%c0_51, %c0_52, %c0_53] : memref<4x6x6xf32, #tpu.memory_space<vmem>>, vector<4x5x6xf32>
    tpu.vector_store %arg6[%c0_51, %c0_52, %c0_53], %24 {strides = array<i32>} : memref<4x6x6xf32, #tpu.memory_space<vmem>>, vector<4x5x6xf32>,
    %c0_54 = arith.constant 0 : index
    %c0_55 = arith.constant 0 : index
    %c0_56 = arith.constant 0 : index
    %26 = vector.load %arg6[%c0_54, %c0_55, %c0_56] : memref<4x6x6xf32, #tpu.memory_space<vmem>>, vector<4x6x6xf32>
    %27 = tpu.transpose %26, [0, 2, 1] : vector<4x6x6xf32> -> vector<4x6x6xf32>
    %c0_57 = arith.constant 0 : index
    %c0_58 = arith.constant 0 : index
    %c0_59 = arith.constant 0 : index
    %c0_60 = arith.constant 0 : index
    %28 = vector.load %arg3[%c0_57, %c0_58, %c0_59, %c0_60] : memref<1x4x6x6xf32, #tpu.memory_space<vmem>>, vector<1x4x6x6xf32>
    %29 = vector.shape_cast %28 : vector<1x4x6x6xf32> to vector<4x6x6xf32>
    %30 = vector.shape_cast %27 : vector<4x6x6xf32> to vector<1x4x6x6xf32>
    tpu.vector_store %arg3[%c0_57, %c0_58, %c0_59, %c0_60], %30 {strides = array<i32>} : memref<1x4x6x6xf32, #tpu.memory_space<vmem>>, vector<1x4x6x6xf32>,
    return
  }
  func.func @transform_0(%arg0: i32, %arg1: i32) -> (i32, i32, i32, i32) {
    %c0_i32 = arith.constant 0 : i32
    %c0_i32_0 = arith.constant 0 : i32
    %c0_i32_1 = arith.constant 0 : i32
    return %arg0, %arg1, %c0_i32, %c0_i32_0 : i32, i32, i32, i32
  }
  func.func @transform_1(%arg0: i32, %arg1: i32) -> (i32, i32, i32, i32) {
    %c0_i32 = arith.constant 0 : i32
    %c0_i32_0 = arith.constant 0 : i32
    %c0_i32_1 = arith.constant 0 : i32
    return %arg0, %arg1, %c0_i32, %c0_i32_0 : i32, i32, i32, i32
  }
}

</mosaic_0001>

<llo_original>
// kernel: tpu_custom_call.1
$region0: #{tpu_custom_call.1}
  #allocation0 [shape = 'u32[]', space=smem, size = 0x4, offset = 0x4, fixed_abs, tag = 'smem constant byte address 0x4 - core index']
  #allocation1 [shape = 'u32[144,128]{1,0:T(1,128)}', space=vmem, size = 0x12000, scoped, tag = 'internal scratch']
  #allocation2 [shape = 'f32[4,6,16]{2,1,0:T(8,128)}', space=vmem, size = 0x4000, scoped, tag = 'scratch operand']
  #allocation3 [shape = 'f32[4,16,6]{2,1,0:T(8,128)}', space=vmem, size = 0x8000, scoped, tag = 'scratch operand']
  #allocation4 [shape = 'f32[4,6,6]{2,1,0:T(8,128)}', space=vmem, size = 0x4000, scoped, tag = 'scratch operand']
  %s0 = inlined_call_operand.hbm [shape: f32[2,4,16,16], index: 0, kind: input, shape index: {}]
  %s1 = inlined_call_operand.vmem [shape: f32[2,4,6,6], index: 1, kind: output, shape index: {}]
  %s2 = sld [smem:[#allocation0]]
  $region41: #{tpu_custom_call.1} parent=0
    _
  %s4 = ssub.s32 1, %s2
  %s5 = scalar_select 0, %s4, %s2
  $region1: #{tpu_custom_call.1} parent=0
    #allocation5 [shape = 'u8[65536]{0}', space=vmem, size = 0x10000, scoped, tag = 'input window, operand 0']
    #allocation6 [shape = 's32[2]{0}', space=sflag, size = 0x8, scoped, tag = 'scoped memory for tpu_custom_call.1']
    %6 = vsyncpa [#allocation6], 0
    %s7 = scalar_lea.sflag [#allocation6], 1
    %8 = vsyncpa %s7, 0
    loop: start=0, step=1, limit=4
    $region2: #{tpu_custom_call.1} parent=1 // loop_pre_header
      _
    $region3: #{tpu_custom_call.1} parent=1 // loop_header
      %s10 = sphi 0, %s14
      %p11 = scmp.ge.s32.totalorder %s10, 4
      %s17 = sphi 0, %s29
      %s18 = sphi 0, %s25
      %s19 = sphi 0, %s17
      %s20 = sphi 0, %s18
      %s21 = sphi 0, %s19
      %s22 = sphi 0, %s20
      %s34 = sphi 0, %s36
      %s37 = sphi 0, %s34
      %s38 = sphi 0, %s37
      %s54 = sphi 0, %s38
      %s62 = sphi 0, %s64
      %s65 = sphi 0, %s62
      %s66 = sphi 0, %s65
      %s82 = sphi 0, %s66
    $region4: #{tpu_custom_call.1} parent=1 // loop_header_branch
      %13 = sbr.rel (%p11) target = $region8
    $region5: #{tpu_custom_call.1} parent=1 // loop_body
      %s15 = ssub.s32 %s10, 1
      %s16 = ssub.s32 %s10, 2
      %s23 = sadd.s32 1, %s18
      %p24 = scmp.ge.s32.totalorder %s23, 1
      %s25 = scalar_select %p24, 0, %s23
      %s26 = sadd.s32 1, %s17
      %s27 = scalar_select %p24, %s26, %s17
      %p28 = scmp.ge.s32.totalorder %s27, 2
      %s29 = scalar_select %p28, 0, %s27
      %s30 = ssub.s32 %s17, %s29
      %s31 = ssub.s32 %s18, %s25
      %s32 = sor.u32 %s30, %s31
      %p33 = scmp.eq.s32.totalorder %s32, 0
      %s35 = sadd.s32 %s34, 1
      %s36 = scalar_select %p33, %s34, %s35
      %p39 = pneg %p33
      %p40 = scmp.eq.s32.totalorder %s10, 1
      %p41 = por %p39, %p40
      %p42 = scmp.ne.s32.totalorder %s34, %s37
      %p43 = scmp.eq.s32.totalorder %s10, 0
      %p44 = por %p42, %p43
      %p45 = scmp.ne.s32.totalorder %s34, %s37
      %p46 = scmp.eq.s32.totalorder %s15, 1
      %p47 = por %p45, %p46
      %p48 = scmp.ne.s32.totalorder %s37, %s38
      %p49 = scmp.eq.s32.totalorder %s15, 0
      %p50 = por %p48, %p49
      %p51 = scmp.ne.s32.totalorder %s37, %s38
      %p52 = scmp.eq.s32.totalorder %s16, 1
      %p53 = por %p51, %p52
      %p55 = scmp.ne.s32.totalorder %s38, %s54
      %p56 = scmp.eq.s32.totalorder %s16, 0
      %p57 = por %p55, %p56
      %s58 = ssub.s32 %s17, %s29
      %s59 = ssub.s32 %s18, %s25
      %s60 = sor.u32 %s58, %s59
      %p61 = scmp.eq.s32.totalorder %s60, 0
      %s63 = sadd.s32 %s62, 1
      %s64 = scalar_select %p61, %s62, %s63
      %p67 = pneg %p61
      %p68 = scmp.eq.s32.totalorder %s10, 1
      %p69 = por %p67, %p68
      %p70 = scmp.ne.s32.totalorder %s62, %s65
      %p71 = scmp.eq.s32.totalorder %s10, 0
      %p72 = por %p70, %p71
      %p73 = scmp.ne.s32.totalorder %s62, %s65
      %p74 = scmp.eq.s32.totalorder %s15, 1
      %p75 = por %p73, %p74
      %p76 = scmp.ne.s32.totalorder %s65, %s66
      %p77 = scmp.eq.s32.totalorder %s15, 0
      %p78 = por %p76, %p77
      %p79 = scmp.ne.s32.totalorder %s65, %s66
      %p80 = scmp.eq.s32.totalorder %s16, 1
      %p81 = por %p79, %p80
      %p83 = scmp.ne.s32.totalorder %s66, %s82
      %p84 = scmp.eq.s32.totalorder %s16, 0
      %p85 = por %p83, %p84
      %p86 = scmp.le.s32.totalorder 1, %s10
      %p87 = scmp.lt.s32.totalorder %s10, 3
      %p88 = pnand %p86, %p87
      %p89 = pneg %p88
      // Predicated region
      $region9: #{tpu_custom_call.1} parent=5 // pred_check
        _
      $region10: #{tpu_custom_call.1} parent=5 // pred_check_branch
        %91 = sbr.rel (%p88) target = $region12
      $region11: #{tpu_custom_call.1} parent=5 // pred_region
        %s92 = ssub.s32 %s10, 1
      $region12: #{tpu_custom_call.1} parent=5 // pred_fallthru
        _
      %p93 = scmp.lt.s32.totalorder %s10, 2
      // Predicated region
      $region13: #{tpu_custom_call.1} parent=5 // pred_check
        %p94 = pneg %p93
      $region14: #{tpu_custom_call.1} parent=5 // pred_check_branch
        %96 = sbr.rel (%p94) target = $region16
      $region15: #{tpu_custom_call.1} parent=5 // pred_region
        // Predicated region
        $region17: #{tpu_custom_call.1} parent=15 // pred_check
          %p97 = pneg %p44
        $region18: #{tpu_custom_call.1} parent=15 // pred_check_branch
          %99 = sbr.rel (%p97) target = $region20
        $region19: #{tpu_custom_call.1} parent=15 // pred_region
          %s100 = sand.u32 %s34, 1
          %s101 = scalar_lea.sflag [#allocation6], %s100
          %s102 = sand.u32 %s34, 1
          %s103 = smul.addr %s102, 64
          %s104 = scalar_lea.vmem [#allocation5], %s103
          %s105 = smul.u32 4, %s18
          %s107 = ssub.s32 1024, 1024
          %108 = vsyncadd %s101, %s107
          %s109 = smul.addr %s105, 2
          %s110 = smul.addr %s17, 8
          %s111 = sadd.s32 %s109, %s110
          %s112 = smul.addr %s111, 128
          %s113 = scalar_lea.hbm %s0, %s112
          %s114 = sshll.u32 %s104, 4
          %s115 = int_to_ptr.vmem [resolvable:$true] %s114
          %120 = dma.hbm_to_vmem [thread:$0]  %s113, 1024, %s115, %s101, 128, 128, 8
        $region20: #{tpu_custom_call.1} parent=15 // pred_fallthru
          _
      $region16: #{tpu_custom_call.1} parent=5 // pred_fallthru
        _
      %p121 = scmp.le.s32.totalorder 1, %s10
      %p122 = scmp.lt.s32.totalorder %s10, 3
      %p123 = pnand %p121, %p122
      %p124 = pneg %p123
      // Predicated region
      $region21: #{tpu_custom_call.1} parent=5 // pred_check
        _
      $region22: #{tpu_custom_call.1} parent=5 // pred_check_branch
        %126 = sbr.rel (%p123) target = $region24
      $region23: #{tpu_custom_call.1} parent=5 // pred_region
        %s127 = ssub.s32 %s10, 1
        %s128 = sand.u32 %s37, 1
        %s129 = scalar_lea.sflag [#allocation6], %s128
        %s130 = sand.u32 %s37, 1
        %s131 = smul.addr %s130, 64
        %s132 = scalar_lea.vmem [#allocation5], %s131
        // Predicated region
        $region25: #{tpu_custom_call.1} parent=23 // pred_check
          %p133 = pneg %p50
        $region26: #{tpu_custom_call.1} parent=23 // pred_check_branch
          %135 = sbr.rel (%p133) target = $region28
        $region27: #{tpu_custom_call.1} parent=23 // pred_region
          %136 = dma.done %s129, 1024
        $region28: #{tpu_custom_call.1} parent=23 // pred_fallthru
          _
        %s137 = sand.u32 %s37, 1
        %s138 = scalar_lea.sflag [#allocation6], %s137
        %s139 = sand.u32 %s37, 1
        %s140 = smul.addr %s139, 64
        %s141 = scalar_lea.vmem [#allocation5], %s140
        %p142 = pneg %p50
        %p143 = pneg %p47
        %p144 = pneg %p78
        %p145 = pneg %p75
        %s146 = smul.u32 4, %s20
        %p147 = scmp.lt.s32.totalorder %s19, 1
        %s148 = scalar_select %p147, %s19, 1
        %p149 = scmp.lt.s32.totalorder %s146, 3
        %s150 = scalar_select %p149, %s146, 3
        %s151 = smul.addr %s148, 4
        %s152 = sadd.s32 %s150, %s151
        %s153 = smul.addr %s152, 8
        %s154 = scalar_lea.vmem %s1, %s153
        %s155 = smul.u32 4, %s20
        %s156 = smul.u32 4, %s20
        %p157 = scmp.lt.s32.totalorder %s19, 1
        %s158 = scalar_select %p157, %s19, 1
        %p159 = scmp.lt.s32.totalorder %s156, 3
        %s160 = scalar_select %p159, %s156, 3
        %s161 = smul.addr %s158, 4
        %s162 = sadd.s32 %s160, %s161
        %s163 = smul.addr %s162, 8
        %s164 = scalar_lea.vmem %s1, %s163
        %s165 = smul.u32 4, %s20
        %v166 = vld [vmem:[%s132] ss:$3 sm:$0x3f]
        %s167 = scalar_lea.vmem %s132, 16 [#allocation5]
        %v168 = vld [vmem:[%s167] ss:$3 sm:$0x3f]
        %s169 = scalar_lea.vmem %s132, 32 [#allocation5]
        %v170 = vld [vmem:[%s169] ss:$3 sm:$0x3f]
        %s171 = scalar_lea.vmem %s132, 48 [#allocation5]
        %v172 = vld [vmem:[%s171] ss:$3 sm:$0x3f]
        %vm173 = vcmask 128000
        %174 = vst.msk [vmem:[#allocation2] sm:$0x3f] %vm173, %v166
        %175 = vst.msk [vmem:[#allocation2 + $0x8] sm:$0x3f] %vm173, %v168
        %176 = vst.msk [vmem:[#allocation2 + $0x10] sm:$0x3f] %vm173, %v170
        %177 = vst.msk [vmem:[#allocation2 + $0x18] sm:$0x3f] %vm173, %v172
        %s178 = scalar_lea.vmem %s132, 2 [#allocation5]
        %v179 = vld [vmem:[%s178] ss:$3 sm:$0x1f]
        %s180 = scalar_lea.vmem %s132, 18 [#allocation5]
        %v181 = vld [vmem:[%s180] ss:$3 sm:$0x1f]
        %s182 = scalar_lea.vmem %s132, 34 [#allocation5]
        %v183 = vld [vmem:[%s182] ss:$3 sm:$0x1f]
        %s184 = scalar_lea.vmem %s132, 50 [#allocation5]
        %v185 = vld [vmem:[%s184] ss:$3 sm:$0x1f]
        %v186 = vld [vmem:[#allocation2 + $0x1] sm:$0x1f]
        %v187 = vld [vmem:[#allocation2 + $0x9] sm:$0x1f]
        %v188 = vld [vmem:[#allocation2 + $0x11] sm:$0x1f]
        %v189 = vld [vmem:[#allocation2 + $0x19] sm:$0x1f]
        %v190 = vmax.f32 %v186, %v179
        %v191 = vmax.f32 %v187, %v181
        %v192 = vmax.f32 %v188, %v183
        %v193 = vmax.f32 %v189, %v185
        %vm194 = vcmask 126976
        %195 = vst.msk [vmem:[#allocation2 + $0x1] sm:$0x1f] %vm194, %v190
        %196 = vst.msk [vmem:[#allocation2 + $0x9] sm:$0x1f] %vm194, %v191
        %197 = vst.msk [vmem:[#allocation2 + $0x11] sm:$0x1f] %vm194, %v192
        %198 = vst.msk [vmem:[#allocation2 + $0x19] sm:$0x1f] %vm194, %v193
        %s199 = scalar_lea.vmem %s132, 1 [#allocation5]
        %v200 = vld [vmem:[%s199] ss:$3 sm:$0x1f]
        %s201 = scalar_lea.vmem %s132, 17 [#allocation5]
        %v202 = vld [vmem:[%s201] ss:$3 sm:$0x1f]
        %s203 = scalar_lea.vmem %s132, 33 [#allocation5]
        %v204 = vld [vmem:[%s203] ss:$3 sm:$0x1f]
        %s205 = scalar_lea.vmem %s132, 49 [#allocation5]
        %v206 = vld [vmem:[%s205] ss:$3 sm:$0x1f]
        %v207 = vld [vmem:[#allocation2] sm:$0x1f]
        %v208 = vld [vmem:[#allocation2 + $0x8] sm:$0x1f]
        %v209 = vld [vmem:[#allocation2 + $0x10] sm:$0x1f]
        %v210 = vld [vmem:[#allocation2 + $0x18] sm:$0x1f]
        %v211 = vmax.f32 %v207, %v200
        %v212 = vmax.f32 %v208, %v202
        %v213 = vmax.f32 %v209, %v204
        %v214 = vmax.f32 %v210, %v206
        %215 = vst.msk [vmem:[#allocation2] sm:$0x1f] %vm194, %v211
        %216 = vst.msk [vmem:[#allocation2 + $0x8] sm:$0x1f] %vm194, %v212
        %217 = vst.msk [vmem:[#allocation2 + $0x10] sm:$0x1f] %vm194, %v213
        %218 = vst.msk [vmem:[#allocation2 + $0x18] sm:$0x1f] %vm194, %v214
        %v219 = vld [vmem:[#allocation2] sm:$0x3f]
        %v220 = vld [vmem:[#allocation2 + $0x8] sm:$0x3f]
        %v221 = vld [vmem:[#allocation2 + $0x10] sm:$0x3f]
        %v222 = vld [vmem:[#allocation2 + $0x18] sm:$0x3f]
        %223 = vxpose.xlu0.b32.start [1/16] %v219, 128
        %224 = vxpose.xlu0.b32.cont [2/16] 0.0, 128
        %225 = vxpose.xlu0.b32.cont [3/16] 0.0, 128
        %226 = vxpose.xlu0.b32.cont [4/16] 0.0, 128
        %227 = vxpose.xlu0.b32.cont [5/16] 0.0, 128
        %228 = vxpose.xlu0.b32.cont [6/16] 0.0, 128
        %229 = vxpose.xlu0.b32.cont [7/16] 0.0, 128
        %230 = vxpose.xlu0.b32.cont [8/16] 0.0, 128
        %231 = vxpose.xlu0.b32.cont [9/16] 0.0, 128
        %232 = vxpose.xlu0.b32.cont [10/16] 0.0, 128
        %233 = vxpose.xlu0.b32.cont [11/16] 0.0, 128
        %234 = vxpose.xlu0.b32.cont [12/16] 0.0, 128
        %235 = vxpose.xlu0.b32.cont [13/16] 0.0, 128
        %236 = vxpose.xlu0.b32.cont [14/16] 0.0, 128
        %237 = vxpose.xlu0.b32.cont [15/16] 0.0, 128
        %238 = vxpose.xlu0.b32.end [16/16] 0.0, 128
        %v239 = vpop.trf.xlu0
        %v240 = vpop.trf.xlu0
        %v241 = vpop.trf.xlu0
        %v242 = vpop.trf.xlu0
        %v243 = vpop.trf.xlu0
        %v244 = vpop.trf.xlu0
        %v245 = vpop.trf.xlu0
        %v246 = vpop.trf.xlu0
        %v247 = vpop.trf.xlu0
        %v248 = vpop.trf.xlu0
        %v249 = vpop.trf.xlu0
        %v250 = vpop.trf.xlu0
        %v251 = vpop.trf.xlu0
        %v252 = vpop.trf.xlu0
        %v253 = vpop.trf.xlu0
        %v254 = vpop.trf.xlu0
        %255 = vxpose.xlu0.b32.start [1/16] %v220, 128
        %256 = vxpose.xlu0.b32.cont [2/16] 0.0, 128
        %257 = vxpose.xlu0.b32.cont [3/16] 0.0, 128
        %258 = vxpose.xlu0.b32.cont [4/16] 0.0, 128
        %259 = vxpose.xlu0.b32.cont [5/16] 0.0, 128
        %260 = vxpose.xlu0.b32.cont [6/16] 0.0, 128
        %261 = vxpose.xlu0.b32.cont [7/16] 0.0, 128
        %262 = vxpose.xlu0.b32.cont [8/16] 0.0, 128
        %263 = vxpose.xlu0.b32.cont [9/16] 0.0, 128
        %264 = vxpose.xlu0.b32.cont [10/16] 0.0, 128
        %265 = vxpose.xlu0.b32.cont [11/16] 0.0, 128
        %266 = vxpose.xlu0.b32.cont [12/16] 0.0, 128
        %267 = vxpose.xlu0.b32.cont [13/16] 0.0, 128
        %268 = vxpose.xlu0.b32.cont [14/16] 0.0, 128
        %269 = vxpose.xlu0.b32.cont [15/16] 0.0, 128
        %270 = vxpose.xlu0.b32.end [16/16] 0.0, 128
        %v271 = vpop.trf.xlu0
        %v272 = vpop.trf.xlu0
        %v273 = vpop.trf.xlu0
        %v274 = vpop.trf.xlu0
        %v275 = vpop.trf.xlu0
        %v276 = vpop.trf.xlu0
        %v277 = vpop.trf.xlu0
        %v278 = vpop.trf.xlu0
        %v279 = vpop.trf.xlu0
        %v280 = vpop.trf.xlu0
        %v281 = vpop.trf.xlu0
        %v282 = vpop.trf.xlu0
        %v283 = vpop.trf.xlu0
        %v284 = vpop.trf.xlu0
        %v285 = vpop.trf.xlu0
        %v286 = vpop.trf.xlu0
        %287 = vxpose.xlu0.b32.start [1/16] %v221, 128
        %288 = vxpose.xlu0.b32.cont [2/16] 0.0, 128
        %289 = vxpose.xlu0.b32.cont [3/16] 0.0, 128
        %290 = vxpose.xlu0.b32.cont [4/16] 0.0, 128
        %291 = vxpose.xlu0.b32.cont [5/16] 0.0, 128
        %292 = vxpose.xlu0.b32.cont [6/16] 0.0, 128
        %293 = vxpose.xlu0.b32.cont [7/16] 0.0, 128
        %294 = vxpose.xlu0.b32.cont [8/16] 0.0, 128
        %295 = vxpose.xlu0.b32.cont [9/16] 0.0, 128
        %296 = vxpose.xlu0.b32.cont [10/16] 0.0, 128
        %297 = vxpose.xlu0.b32.cont [11/16] 0.0, 128
        %298 = vxpose.xlu0.b32.cont [12/16] 0.0, 128
        %299 = vxpose.xlu0.b32.cont [13/16] 0.0, 128
        %300 = vxpose.xlu0.b32.cont [14/16] 0.0, 128
        %301 = vxpose.xlu0.b32.cont [15/16] 0.0, 128
        %302 = vxpose.xlu0.b32.end [16/16] 0.0, 128
        %v303 = vpop.trf.xlu0
        %v304 = vpop.trf.xlu0
        %v305 = vpop.trf.xlu0
        %v306 = vpop.trf.xlu0
        %v307 = vpop.trf.xlu0
        %v308 = vpop.trf.xlu0
        %v309 = vpop.trf.xlu0
        %v310 = vpop.trf.xlu0
        %v311 = vpop.trf.xlu0
        %v312 = vpop.trf.xlu0
        %v313 = vpop.trf.xlu0
        %v314 = vpop.trf.xlu0
        %v315 = vpop.trf.xlu0
        %v316 = vpop.trf.xlu0
        %v317 = vpop.trf.xlu0
        %v318 = vpop.trf.xlu0
        %319 = vxpose.xlu0.b32.start [1/16] %v222, 128
        %320 = vxpose.xlu0.b32.cont [2/16] 0.0, 128
        %321 = vxpose.xlu0.b32.cont [3/16] 0.0, 128
        %322 = vxpose.xlu0.b32.cont [4/16] 0.0, 128
        %323 = vxpose.xlu0.b32.cont [5/16] 0.0, 128
        %324 = vxpose.xlu0.b32.cont [6/16] 0.0, 128
        %325 = vxpose.xlu0.b32.cont [7/16] 0.0, 128
        %326 = vxpose.xlu0.b32.cont [8/16] 0.0, 128
        %327 = vxpose.xlu0.b32.cont [9/16] 0.0, 128
        %328 = vxpose.xlu0.b32.cont [10/16] 0.0, 128
        %329 = vxpose.xlu0.b32.cont [11/16] 0.0, 128
        %330 = vxpose.xlu0.b32.cont [12/16] 0.0, 128
        %331 = vxpose.xlu0.b32.cont [13/16] 0.0, 128
        %332 = vxpose.xlu0.b32.cont [14/16] 0.0, 128
        %333 = vxpose.xlu0.b32.cont [15/16] 0.0, 128
        %334 = vxpose.xlu0.b32.end [16/16] 0.0, 128
        %v335 = vpop.trf.xlu0
        %v336 = vpop.trf.xlu0
        %v337 = vpop.trf.xlu0
        %v338 = vpop.trf.xlu0
        %v339 = vpop.trf.xlu0
        %v340 = vpop.trf.xlu0
        %v341 = vpop.trf.xlu0
        %v342 = vpop.trf.xlu0
        %v343 = vpop.trf.xlu0
        %v344 = vpop.trf.xlu0
        %v345 = vpop.trf.xlu0
        %v346 = vpop.trf.xlu0
        %v347 = vpop.trf.xlu0
        %v348 = vpop.trf.xlu0
        %v349 = vpop.trf.xlu0
        %v350 = vpop.trf.xlu0
        %vm351 = vcmask 48128
        %352 = vst.msk [vmem:[#allocation3] sm:$0xff] %vm351, %v239
        %353 = vst.msk [vmem:[#allocation3 + $0x8] sm:$0xff] %vm351, %v240
        %354 = vst.msk [vmem:[#allocation3 + $0x10] sm:$0xff] %vm351, %v271
        %355 = vst.msk [vmem:[#allocation3 + $0x18] sm:$0xff] %vm351, %v272
        %356 = vst.msk [vmem:[#allocation3 + $0x20] sm:$0xff] %vm351, %v303
        %357 = vst.msk [vmem:[#allocation3 + $0x28] sm:$0xff] %vm351, %v304
        %358 = vst.msk [vmem:[#allocation3 + $0x30] sm:$0xff] %vm351, %v335
        %359 = vst.msk [vmem:[#allocation3 + $0x38] sm:$0xff] %vm351, %v336
        %v360 = vld [vmem:[#allocation3] ss:$3 sm:$0x3f]
        %s361 = scalar_lea.vmem [#allocation3], 16
        %v362 = vld [vmem:[%s361] ss:$3 sm:$0x3f]
        %s363 = scalar_lea.vmem [#allocation3], 32
        %v364 = vld [vmem:[%s363] ss:$3 sm:$0x3f]
        %s365 = scalar_lea.vmem [#allocation3], 48
        %v366 = vld [vmem:[%s365] ss:$3 sm:$0x3f]
        %vm367 = vcmask 46080
        %368 = vst.msk [vmem:[#allocation4] sm:$0x3f] %vm367, %v360
        %369 = vst.msk [vmem:[#allocation4 + $0x8] sm:$0x3f] %vm367, %v362
        %370 = vst.msk [vmem:[#allocation4 + $0x10] sm:$0x3f] %vm367, %v364
        %371 = vst.msk [vmem:[#allocation4 + $0x18] sm:$0x3f] %vm367, %v366
        %s372 = scalar_lea.vmem [#allocation3], 2
        %v373 = vld [vmem:[%s372] ss:$3 sm:$0x1f]
        %s374 = scalar_lea.vmem [#allocation3], 18
        %v375 = vld [vmem:[%s374] ss:$3 sm:$0x1f]
        %s376 = scalar_lea.vmem [#allocation3], 34
        %v377 = vld [vmem:[%s376] ss:$3 sm:$0x1f]
        %s378 = scalar_lea.vmem [#allocation3], 50
        %v379 = vld [vmem:[%s378] ss:$3 sm:$0x1f]
        %v380 = vld [vmem:[#allocation4 + $0x1] sm:$0x1f]
        %v381 = vld [vmem:[#allocation4 + $0x9] sm:$0x1f]
        %v382 = vld [vmem:[#allocation4 + $0x11] sm:$0x1f]
        %v383 = vld [vmem:[#allocation4 + $0x19] sm:$0x1f]
        %v384 = vmax.f32 %v380, %v373
        %v385 = vmax.f32 %v381, %v375
        %v386 = vmax.f32 %v382, %v377
        %v387 = vmax.f32 %v383, %v379
        %vm388 = vcmask 45056
        %389 = vst.msk [vmem:[#allocation4 + $0x1] sm:$0x1f] %vm388, %v384
        %390 = vst.msk [vmem:[#allocation4 + $0x9] sm:$0x1f] %vm388, %v385
        %391 = vst.msk [vmem:[#allocation4 + $0x11] sm:$0x1f] %vm388, %v386
        %392 = vst.msk [vmem:[#allocation4 + $0x19] sm:$0x1f] %vm388, %v387
        %s393 = scalar_lea.vmem [#allocation3], 1
        %v394 = vld [vmem:[%s393] ss:$3 sm:$0x1f]
        %s395 = scalar_lea.vmem [#allocation3], 17
        %v396 = vld [vmem:[%s395] ss:$3 sm:$0x1f]
        %s397 = scalar_lea.vmem [#allocation3], 33
        %v398 = vld [vmem:[%s397] ss:$3 sm:$0x1f]
        %s399 = scalar_lea.vmem [#allocation3], 49
        %v400 = vld [vmem:[%s399] ss:$3 sm:$0x1f]
        %v401 = vld [vmem:[#allocation4] sm:$0x1f]
        %v402 = vld [vmem:[#allocation4 + $0x8] sm:$0x1f]
        %v403 = vld [vmem:[#allocation4 + $0x10] sm:$0x1f]
        %v404 = vld [vmem:[#allocation4 + $0x18] sm:$0x1f]
        %v405 = vmax.f32 %v401, %v394
        %v406 = vmax.f32 %v402, %v396
        %v407 = vmax.f32 %v403, %v398
        %v408 = vmax.f32 %v404, %v400
        %409 = vst.msk [vmem:[#allocation4] sm:$0x1f] %vm388, %v405
        %410 = vst.msk [vmem:[#allocation4 + $0x8] sm:$0x1f] %vm388, %v406
        %411 = vst.msk [vmem:[#allocation4 + $0x10] sm:$0x1f] %vm388, %v407
        %412 = vst.msk [vmem:[#allocation4 + $0x18] sm:$0x1f] %vm388, %v408
        %v413 = vld [vmem:[#allocation4] sm:$0x3f]
        %v414 = vld [vmem:[#allocation4 + $0x8] sm:$0x3f]
        %v415 = vld [vmem:[#allocation4 + $0x10] sm:$0x3f]
        %v416 = vld [vmem:[#allocation4 + $0x18] sm:$0x3f]
        %417 = vxpose.xlu0.b32.start [1/16] %v413, 128
        %418 = vxpose.xlu0.b32.cont [2/16] 0.0, 128
        %419 = vxpose.xlu0.b32.cont [3/16] 0.0, 128
        %420 = vxpose.xlu0.b32.cont [4/16] 0.0, 128
        %421 = vxpose.xlu0.b32.cont [5/16] 0.0, 128
        %422 = vxpose.xlu0.b32.cont [6/16] 0.0, 128
        %423 = vxpose.xlu0.b32.cont [7/16] 0.0, 128
        %424 = vxpose.xlu0.b32.cont [8/16] 0.0, 128
        %425 = vxpose.xlu0.b32.cont [9/16] 0.0, 128
        %426 = vxpose.xlu0.b32.cont [10/16] 0.0, 128
        %427 = vxpose.xlu0.b32.cont [11/16] 0.0, 128
        %428 = vxpose.xlu0.b32.cont [12/16] 0.0, 128
        %429 = vxpose.xlu0.b32.cont [13/16] 0.0, 128
        %430 = vxpose.xlu0.b32.cont [14/16] 0.0, 128
        %431 = vxpose.xlu0.b32.cont [15/16] 0.0, 128
        %432 = vxpose.xlu0.b32.end [16/16] 0.0, 128
        %v433 = vpop.trf.xlu0
        %v434 = vpop.trf.xlu0
        %v435 = vpop.trf.xlu0
        %v436 = vpop.trf.xlu0
        %v437 = vpop.trf.xlu0
        %v438 = vpop.trf.xlu0
        %v439 = vpop.trf.xlu0
        %v440 = vpop.trf.xlu0
        %v441 = vpop.trf.xlu0
        %v442 = vpop.trf.xlu0
        %v443 = vpop.trf.xlu0
        %v444 = vpop.trf.xlu0
        %v445 = vpop.trf.xlu0
        %v446 = vpop.trf.xlu0
        %v447 = vpop.trf.xlu0
        %v448 = vpop.trf.xlu0
        %449 = vxpose.xlu0.b32.start [1/16] %v414, 128
        %450 = vxpose.xlu0.b32.cont [2/16] 0.0, 128
        %451 = vxpose.xlu0.b32.cont [3/16] 0.0, 128
        %452 = vxpose.xlu0.b32.cont [4/16] 0.0, 128
        %453 = vxpose.xlu0.b32.cont [5/16] 0.0, 128
        %454 = vxpose.xlu0.b32.cont [6/16] 0.0, 128
        %455 = vxpose.xlu0.b32.cont [7/16] 0.0, 128
        %456 = vxpose.xlu0.b32.cont [8/16] 0.0, 128
        %457 = vxpose.xlu0.b32.cont [9/16] 0.0, 128
        %458 = vxpose.xlu0.b32.cont [10/16] 0.0, 128
        %459 = vxpose.xlu0.b32.cont [11/16] 0.0, 128
        %460 = vxpose.xlu0.b32.cont [12/16] 0.0, 128
        %461 = vxpose.xlu0.b32.cont [13/16] 0.0, 128
        %462 = vxpose.xlu0.b32.cont [14/16] 0.0, 128
        %463 = vxpose.xlu0.b32.cont [15/16] 0.0, 128
        %464 = vxpose.xlu0.b32.end [16/16] 0.0, 128
        %v465 = vpop.trf.xlu0
        %v466 = vpop.trf.xlu0
        %v467 = vpop.trf.xlu0
        %v468 = vpop.trf.xlu0
        %v469 = vpop.trf.xlu0
        %v470 = vpop.trf.xlu0
        %v471 = vpop.trf.xlu0
        %v472 = vpop.trf.xlu0
        %v473 = vpop.trf.xlu0
        %v474 = vpop.trf.xlu0
        %v475 = vpop.trf.xlu0
        %v476 = vpop.trf.xlu0
        %v477 = vpop.trf.xlu0
        %v478 = vpop.trf.xlu0
        %v479 = vpop.trf.xlu0
        %v480 = vpop.trf.xlu0
        %481 = vxpose.xlu0.b32.start [1/16] %v415, 128
        %482 = vxpose.xlu0.b32.cont [2/16] 0.0, 128
        %483 = vxpose.xlu0.b32.cont [3/16] 0.0, 128
        %484 = vxpose.xlu0.b32.cont [4/16] 0.0, 128
        %485 = vxpose.xlu0.b32.cont [5/16] 0.0, 128
        %486 = vxpose.xlu0.b32.cont [6/16] 0.0, 128
        %487 = vxpose.xlu0.b32.cont [7/16] 0.0, 128
        %488 = vxpose.xlu0.b32.cont [8/16] 0.0, 128
        %489 = vxpose.xlu0.b32.cont [9/16] 0.0, 128
        %490 = vxpose.xlu0.b32.cont [10/16] 0.0, 128
        %491 = vxpose.xlu0.b32.cont [11/16] 0.0, 128
        %492 = vxpose.xlu0.b32.cont [12/16] 0.0, 128
        %493 = vxpose.xlu0.b32.cont [13/16] 0.0, 128
        %494 = vxpose.xlu0.b32.cont [14/16] 0.0, 128
        %495 = vxpose.xlu0.b32.cont [15/16] 0.0, 128
        %496 = vxpose.xlu0.b32.end [16/16] 0.0, 128
        %v497 = vpop.trf.xlu0
        %v498 = vpop.trf.xlu0
        %v499 = vpop.trf.xlu0
        %v500 = vpop.trf.xlu0
        %v501 = vpop.trf.xlu0
        %v502 = vpop.trf.xlu0
        %v503 = vpop.trf.xlu0
        %v504 = vpop.trf.xlu0
        %v505 = vpop.trf.xlu0
        %v506 = vpop.trf.xlu0
        %v507 = vpop.trf.xlu0
        %v508 = vpop.trf.xlu0
        %v509 = vpop.trf.xlu0
        %v510 = vpop.trf.xlu0
        %v511 = vpop.trf.xlu0
        %v512 = vpop.trf.xlu0
        %513 = vxpose.xlu0.b32.start [1/16] %v416, 128
        %514 = vxpose.xlu0.b32.cont [2/16] 0.0, 128
        %515 = vxpose.xlu0.b32.cont [3/16] 0.0, 128
        %516 = vxpose.xlu0.b32.cont [4/16] 0.0, 128
        %517 = vxpose.xlu0.b32.cont [5/16] 0.0, 128
        %518 = vxpose.xlu0.b32.cont [6/16] 0.0, 128
        %519 = vxpose.xlu0.b32.cont [7/16] 0.0, 128
        %520 = vxpose.xlu0.b32.cont [8/16] 0.0, 128
        %521 = vxpose.xlu0.b32.cont [9/16] 0.0, 128
        %522 = vxpose.xlu0.b32.cont [10/16] 0.0, 128
        %523 = vxpose.xlu0.b32.cont [11/16] 0.0, 128
        %524 = vxpose.xlu0.b32.cont [12/16] 0.0, 128
        %525 = vxpose.xlu0.b32.cont [13/16] 0.0, 128
        %526 = vxpose.xlu0.b32.cont [14/16] 0.0, 128
        %527 = vxpose.xlu0.b32.cont [15/16] 0.0, 128
        %528 = vxpose.xlu0.b32.end [16/16] 0.0, 128
        %v529 = vpop.trf.xlu0
        %v530 = vpop.trf.xlu0
        %v531 = vpop.trf.xlu0
        %v532 = vpop.trf.xlu0
        %v533 = vpop.trf.xlu0
        %v534 = vpop.trf.xlu0
        %v535 = vpop.trf.xlu0
        %v536 = vpop.trf.xlu0
        %v537 = vpop.trf.xlu0
        %v538 = vpop.trf.xlu0
        %v539 = vpop.trf.xlu0
        %v540 = vpop.trf.xlu0
        %v541 = vpop.trf.xlu0
        %v542 = vpop.trf.xlu0
        %v543 = vpop.trf.xlu0
        %v544 = vpop.trf.xlu0
        %545 = vst.msk [vmem:[%s164] sm:$0x3f] %vm367, %v433
        %546 = vst.msk [vmem:[%s164 + $0x8] sm:$0x3f] %vm367, %v465
        %547 = vst.msk [vmem:[%s164 + $0x10] sm:$0x3f] %vm367, %v497
        %548 = vst.msk [vmem:[%s164 + $0x18] sm:$0x3f] %vm367, %v529
        %s549 = smul.u32 4, %s20
        %p550 = scmp.lt.s32.totalorder %s19, 1
        %s551 = scalar_select %p550, %s19, 1
        %p552 = scmp.lt.s32.totalorder %s549, 3
        %s553 = scalar_select %p552, %s549, 3
        %s554 = smul.addr %s551, 4
        %s555 = sadd.s32 %s553, %s554
        %s556 = smul.addr %s555, 8
        %s557 = scalar_lea.vmem %s1, %s556
        // Predicated region
        $region29: #{tpu_custom_call.1} parent=23 // pred_check
          %p558 = pneg %p75
        $region30: #{tpu_custom_call.1} parent=23 // pred_check_branch
          %560 = sbr.rel (%p558) target = $region32
        $region31: #{tpu_custom_call.1} parent=23 // pred_region
          %s561 = smul.u32 4, %s20
        $region32: #{tpu_custom_call.1} parent=23 // pred_fallthru
          _
      $region24: #{tpu_custom_call.1} parent=5 // pred_fallthru
        _
      %p562 = scmp.le.s32.totalorder 2, %s10
      // Predicated region
      $region33: #{tpu_custom_call.1} parent=5 // pred_check
        %p563 = pneg %p562
      $region34: #{tpu_custom_call.1} parent=5 // pred_check_branch
        %565 = sbr.rel (%p563) target = $region36
      $region35: #{tpu_custom_call.1} parent=5 // pred_region
        %s566 = ssub.s32 %s10, 2
        // Predicated region
        $region37: #{tpu_custom_call.1} parent=35 // pred_check
          %p567 = pneg %p81
        $region38: #{tpu_custom_call.1} parent=35 // pred_check_branch
          %569 = sbr.rel (%p567) target = $region40
        $region39: #{tpu_custom_call.1} parent=35 // pred_region
          %s570 = smul.u32 4, %s22
          %p571 = scmp.lt.s32.totalorder %s21, 1
          %s572 = scalar_select %p571, %s21, 1
          %p573 = scmp.lt.s32.totalorder %s570, 3
          %s574 = scalar_select %p573, %s570, 3
          %s575 = smul.addr %s572, 4
          %s576 = sadd.s32 %s574, %s575
          %s577 = smul.addr %s576, 8
          %s578 = scalar_lea.vmem %s1, %s577
        $region40: #{tpu_custom_call.1} parent=35 // pred_fallthru
          _
      $region36: #{tpu_custom_call.1} parent=5 // pred_fallthru
        _
    $region6: #{tpu_custom_call.1} parent=1 // loop_footer
      %s14 = sadd.s32 1, %s10
    $region7: #{tpu_custom_call.1} parent=1 // loop_footer_branch
      %9 = sbr.rel target = $region3
    $region8: #{tpu_custom_call.1} parent=1 // loop_exit
      _
    %579 = vsyncpa [#allocation6], 1
    %s580 = scalar_lea.sflag [#allocation6], 1
    %581 = vsyncpa %s580, 1

</llo_original>
